<compile_context>
chip_gen: v7x
topology: tpu7x:2x2x1
jax: 0.10.0
libtpu: 0.0.40
codegen_flags: <defaults>
</compile_context>

<pallas_src>
import functools

import jax
import jax.numpy as jnp
from jax.experimental import pallas as pl
from jax.experimental.pallas import tpu as pltpu

_VMEM = pl.BlockSpec(memory_space=pltpu.MemorySpace.VMEM)


def _round_up(x, m):
    return (x + m - 1) // m * m


def _choose_tile(n):
    """Row-tile size (multiple of 8) and padded node count (multiple of the tile)."""
    n8 = _round_up(n, 8)
    tm = min(256, n8)
    return tm, _round_up(n8, tm)


def _vmem_limit_bytes():
    # Default scoped VMEM (16 MiB v5e / 32 MiB v6e,v7x) binds long before physical;
    # raise it toward chip capacity, leaving headroom for compiler internals.
    try:
        cap = int(pltpu.get_tpu_info().vmem_capacity_bytes)
    except Exception:  # pragma: no cover - conservative fallback
        cap = 64 * 1024 * 1024
    return max(32 * 1024 * 1024, cap - 16 * 1024 * 1024)


# ---------------------------------------------------------------------------
# Pallas kernels
# ---------------------------------------------------------------------------
def _sage_layer_kernel(ap_ref, an_ref, invdeg_ref, hin_full_ref, hin_tile_ref,
                       w_ref, b_ref, gmask_ref, out_ref):
    """One fused signed-SAGE layer for a tile of TM node rows.

    scatter_mean over each edge sign = (A row-tile @ H_full) * inv_degree (bf16 MXU,
    f32 acc); all aggregators of the layer share ONE K-concatenated projection matmul
    [agg_pos | agg_neg | self] @ stacked bf16 weight slab; per-aggregator L2 normalize
    uses a block-diagonal ones matmul + rsqrt (EUP); tanh stays f32 (v5e-safe).
    """
    f32, bf16 = jnp.float32, jnp.bfloat16
    hin = hin_full_ref[...]                       # (Np, Fin) bf16, VMEM-resident
    idp = invdeg_ref[:, 0:1]                      # (TM, 1) f32
    idn = invdeg_ref[:, 1:2]

    agg_p = idp * jnp.dot(ap_ref[...], hin, preferred_element_type=f32)   # (TM, Fin)
    agg_n = idn * jnp.dot(an_ref[...], hin, preferred_element_type=f32)

    lhs = jnp.concatenate(
        [agg_p.astype(bf16), agg_n.astype(bf16), hin_tile_ref[...]], axis=-1)
    h = jnp.dot(lhs, w_ref[...], preferred_element_type=f32) + b_ref[...]

    # F.normalize(p=2, dim=-1) per aggregator block: h * rsqrt(max(||h||^2, 1e-24))
    ss = jnp.dot(h * h, gmask_ref[...], preferred_element_type=f32)
    h = h * jax.lax.rsqrt(jnp.maximum(ss, 1e-24))
    out_ref[...] = jnp.tanh(h).astype(out_ref.dtype)


def _loss_kernel(lamb, n_classes, ep, en, feat_ref, oh_ref, rw_ref, loss_ref):
    """Regression loss (matmul + log_softmax + nll, classes padded to 128 lanes) plus
    both signed embedding losses, all derived from the single `features` operand."""
    f32 = jnp.float32
    feats = feat_ref[...]
    logits = jnp.dot(feats, rw_ref[...], preferred_element_type=f32)
    lane = jax.lax.broadcasted_iota(jnp.int32, logits.shape, 1)
    logits = jnp.where(lane < n_classes, logits, -1e30)        # mask padded classes
    m = jnp.max(logits, axis=-1, keepdims=True)
    lse = m + jnp.log(jnp.sum(jnp.exp(logits - m), axis=-1, keepdims=True))
    reg_loss = -jnp.sum((logits - lse) * oh_ref[...]) / feats.shape[0]

    # feature rows: [pzi|pzj](Ep) [nzi|nzj](En) [nzi|nzk](En) [nzj|nzk](En)
    #               [pzi|pzk](Ep) [pzj|pzk](Ep)
    d = feats.shape[1] // 2
    diff = feats[:, :d] - feats[:, d:]
    sq = jnp.sum(diff * diff, axis=-1, keepdims=True)          # per-row ||left-right||^2
    off_sni = ep + en
    off_spi = ep + 3 * en
    term_p = sq[0:ep] - sq[off_spi:off_spi + ep]               # ||pzi-pzj||^2 - ||pzi-pzk||^2
    term_n = sq[off_sni:off_sni + en] - sq[ep:ep + en]         # ||nzi-nzk||^2 - ||nzi-nzj||^2
    loss_p = jnp.mean(jnp.maximum(term_p, 0.0))
    loss_n = jnp.mean(jnp.maximum(term_n, 0.0))

    loss_ref[...] = jnp.reshape(reg_loss + lamb * (loss_p + loss_n), (1, 1))


# ---------------------------------------------------------------------------
# Step-static preparation (hoist out of the training step in a real loop)
# ---------------------------------------------------------------------------
def prepare_graph(X, positive_edges, negative_edges):
    """remove_self_loops + dense bf16 neighbor counts (exact small ints), packed
    (Np,2) inverse degree, and row-padded bf16 node features."""
    n, f = X.shape
    tm, np_ = _choose_tile(n)

    def adj(edge_index):
        row, col = edge_index[0], edge_index[1]
        keep = (row != col).astype(jnp.float32)                      # remove self loops
        a = jnp.zeros((np_, np_), jnp.bfloat16).at[row, col].add(keep.astype(jnp.bfloat16))
        deg = jnp.zeros((np_, 1), jnp.float32).at[row, 0].add(keep)  # exact f32 counts
        return a, 1.0 / jnp.maximum(deg, 1.0)

    ap, idp = adj(positive_edges)
    an, idn = adj(negative_edges)
    invd = jnp.concatenate([idp, idn], axis=1)                       # (Np, 2) f32
    xp = jnp.zeros((np_, f), jnp.bfloat16).at[:n].set(X.astype(jnp.bfloat16))
    return ap, an, invd, xp, tm, np_


def pack_weights(params, feat_dim, n1, n2):
    """Stacked bf16 weight slabs: one K-concatenated MXU matmul per layer.

    Layer-1 LHS = [agg(X,E+) | agg(X,E-) | X]        -> W1 (3F, 2*n1)
    Layer-2 LHS = [agg(h0,E+) | agg(h0,E-) | h0]     -> W2 (6*n1, 4*n2)
    Output column order matches the reference concatenation order.
    """
    f = feat_dim
    wpos, wneg = params["base_pos_w"], params["base_neg_w"]
    w1 = jnp.zeros((3 * f, 2 * n1), jnp.float32)
    w1 = w1.at[0:f, :n1].set(wpos[:f])            # agg over E+ -> pos base output
    w1 = w1.at[f:2 * f, n1:].set(wneg[:f])        # agg over E- -> neg base output
    w1 = w1.at[2 * f:, :n1].set(wpos[f:])         # self term
    w1 = w1.at[2 * f:, n1:].set(wneg[f:])
    b1 = jnp.concatenate([params["base_pos_b"], params["base_neg_b"]]).reshape(1, 2 * n1)

    w2l = params["l2_w"]
    w2 = jnp.zeros((6 * n1, 4 * n2), jnp.float32)
    w2 = w2.at[0:n1, 0:n2].set(w2l[0][:n1])                  # agg(h0_pos,E+) -> block 0
    w2 = w2.at[n1:2 * n1, 2 * n2:3 * n2].set(w2l[2][:n1])    # agg(h0_neg,E+) -> block 2
    w2 = w2.at[2 * n1:3 * n1, n2:2 * n2].set(w2l[1][:n1])    # agg(h0_pos,E-) -> block 1
    w2 = w2.at[3 * n1:4 * n1, 3 * n2:4 * n2].set(w2l[3][:n1])  # agg(h0_neg,E-) -> block 3
    w2 = w2.at[4 * n1:5 * n1, 0:n2].set(w2l[0][n1:])         # h0_pos self terms
    w2 = w2.at[4 * n1:5 * n1, n2:2 * n2].set(w2l[1][n1:])
    w2 = w2.at[5 * n1:6 * n1, 2 * n2:3 * n2].set(w2l[2][n1:])  # h0_neg self terms
    w2 = w2.at[5 * n1:6 * n1, 3 * n2:4 * n2].set(w2l[3][n1:])
    b2 = jnp.concatenate(params["l2_b"]).reshape(1, 4 * n2)

    def gmask(width, group):
        r = jax.lax.broadcasted_iota(jnp.int32, (width, width), 0) // group
        c = jax.lax.broadcasted_iota(jnp.int32, (width, width), 1) // group
        return (r == c).astype(jnp.float32)

    return dict(w1=w1.astype(jnp.bfloat16), b1=b1,
                w2=w2.astype(jnp.bfloat16), b2=b2,
                g1=gmask(2 * n1, n1), g2=gmask(4 * n2, n2))


def init_params(key, feat_dim, neurons):
    n1, n2 = neurons
    keys = jax.random.split(key, 13)

    def uni(k, shape):
        bound = float(shape[0]) ** -0.5
        return jax.random.uniform(k, shape, jnp.float32, -bound, bound)

    params = {
        "base_pos_w": uni(keys[0], (2 * feat_dim, n1)),
        "base_pos_b": uni(keys[1], (n1,)),
        "base_neg_w": uni(keys[2], (2 * feat_dim, n1)),
        "base_neg_b": uni(keys[3], (n1,)),
        "l2_w": [uni(keys[4 + j], (2 * n1, n2)) for j in range(4)],
        "l2_b": [uni(keys[8 + j], (n2,)) for j in range(4)],
    }
    fan_in, fan_out = 8 * n2, 3          # regression_weights: (2**(m+1)*neurons[-1], 3)
    std = (2.0 / (fan_in + fan_out)) ** 0.5
    params["regression_w"] = std * jax.random.normal(keys[12], (fan_in, 3), jnp.float32)
    return params


# ---------------------------------------------------------------------------
# Forward
# ---------------------------------------------------------------------------
def sgcn_embed(graph, packed, neurons):
    """Two row-tiled pallas_calls: layer-1 -> h0 (Np, 2*n1) bf16, layer-2 -> z (Np, 4*n2)."""
    n1, n2 = neurons
    ap, an, invd, xp, tm, np_ = graph
    f = xp.shape[1]
    grid = (np_ // tm,)
    cparams = pltpu.CompilerParams(dimension_semantics=("parallel",),
                                   vmem_limit_bytes=_vmem_limit_bytes())

    def row_tile(w):
        return pl.BlockSpec((tm, w), lambda i: (i, 0))

    def resident(shape):
        return pl.BlockSpec(shape, lambda i: (0, 0))

    h0 = pl.pallas_call(
        _sage_layer_kernel,
        out_shape=jax.ShapeDtypeStruct((np_, 2 * n1), jnp.bfloat16),
        grid=grid,
        in_specs=[row_tile(np_), row_tile(np_), row_tile(2),
                  resident((np_, f)), row_tile(f),
                  resident((3 * f, 2 * n1)), resident((1, 2 * n1)),
                  resident((2 * n1, 2 * n1))],
        out_specs=row_tile(2 * n1),
        compiler_params=cparams,
    )(ap, an, invd, xp, xp, packed["w1"], packed["b1"], packed["g1"])

    z = pl.pallas_call(
        _sage_layer_kernel,
        out_shape=jax.ShapeDtypeStruct((np_, 4 * n2), jnp.float32),
        grid=grid,
        in_specs=[row_tile(np_), row_tile(np_), row_tile(2),
                  resident((np_, 2 * n1)), row_tile(2 * n1),
                  resident((6 * n1, 4 * n2)), resident((1, 4 * n2)),
                  resident((4 * n2, 4 * n2))],
        out_specs=row_tile(4 * n2),
        compiler_params=cparams,
    )(ap, an, invd, h0, h0, packed["w2"], packed["b2"], packed["g2"])
    return z


def sgcn_forward(params, X, positive_edges, negative_edges, target,
                 pos_surrogates, neg_surrogates, lamb=1.0, neurons=(32, 32)):
    n = X.shape[0]
    # NOTE: graph prep and weight packing are static across training steps; in a real
    # training loop hoist prepare_graph()/pack_weights() outside the jitted step.
    graph = prepare_graph(X, positive_edges, negative_edges)
    packed = pack_weights(params, X.shape[1], *neurons)

    z = sgcn_embed(graph, packed, neurons)[:n]            # (N, 4*n2), lane-dense

    # --- loss (calculate_loss_function) ---
    pe, ne = positive_edges.T, negative_edges.T
    pzi, pzj, pzk = z[pe[:, 0]], z[pe[:, 1]], z[pos_surrogates]
    nzi, nzj, nzk = z[ne[:, 0]], z[ne[:, 1]], z[neg_surrogates]
    features = jnp.concatenate([
        jnp.concatenate([pzi, pzj], axis=1),
        jnp.concatenate([nzi, nzj], axis=1),
        jnp.concatenate([nzi, nzk], axis=1),
        jnp.concatenate([nzj, nzk], axis=1),
        jnp.concatenate([pzi, pzk], axis=1),
        jnp.concatenate([pzj, pzk], axis=1)], axis=0)

    # classes padded 3 -> 128 lanes; padded logits masked in-kernel, one-hot zero-padded.
    n_classes = params["regression_w"].shape[1]
    rw_pad = jnp.zeros((params["regression_w"].shape[0], 128), jnp.float32)
    rw_pad = rw_pad.at[:, :n_classes].set(params["regression_w"])
    onehot = jnp.zeros((features.shape[0], 128), jnp.float32)
    onehot = onehot.at[:, :n_classes].set(jax.nn.one_hot(target, n_classes, dtype=jnp.float32))

    ep, en = pe.shape[0], ne.shape[0]
    loss = pl.pallas_call(
        functools.partial(_loss_kernel, lamb, n_classes, ep, en),
        out_shape=jax.ShapeDtypeStruct((1, 1), jnp.float32),
        in_specs=[_VMEM] * 3,
        out_specs=_VMEM,
    )(features, onehot, rw_pad)
    return loss[0, 0], z


# ---------------------------------------------------------------------------
if __name__ == "__main__":
    key = jax.random.PRNGKey(0)
    N, F = 16, 32          # nodes, node-feature dim
    neurons = (32, 32)     # args.layers ; args.m = 2 -> times=1, r=0
    Ep, En = 10, 8         # positive / negative edge counts

    k_x, k_pe, k_ne, k_ps, k_ns, k_p = jax.random.split(key, 6)
    X = jax.random.normal(k_x, (N, F), jnp.float32)
    positive_edges = jax.random.randint(k_pe, (2, Ep), 0, N, dtype=jnp.int32)
    negative_edges = jax.random.randint(k_ne, (2, En), 0, N, dtype=jnp.int32)
    # TODO(synk): reference samples surrogates with python random.choice at forward
    # time; replaced with a deterministic jax.random draw.
    pos_surrogates = jax.random.randint(k_ps, (Ep,), 0, N, dtype=jnp.int32)
    neg_surrogates = jax.random.randint(k_ns, (En,), 0, N, dtype=jnp.int32)
    # target layout matches feature row order: pos | neg | surrogate rows
    target = jnp.concatenate([
        jnp.zeros((Ep,), jnp.int32),
        jnp.ones((En,), jnp.int32),
        jnp.full((2 * En + 2 * Ep,), 2, jnp.int32),
    ])

    params = init_params(k_p, F, neurons)
    loss, z = sgcn_forward(params, X, positive_edges, negative_edges, target,
                           pos_surrogates, neg_surrogates, lamb=1.0, neurons=neurons)
    jax.block_until_ready((loss, z))
    assert z.shape == (N, 4 * neurons[-1])
    assert bool(jnp.isfinite(loss))
    print("KERNEL_OK")
</pallas_src>

<mosaic_0001>
module attributes {stable_mosaic.version = 11 : i64} {
  func.func @_sage_layer_kernel(%arg0: i32, %arg1: memref<16x16xbf16, #tpu.memory_space<vmem>>, %arg2: memref<16x16xbf16, #tpu.memory_space<vmem>>, %arg3: memref<16x2xf32, #tpu.memory_space<vmem>>, %arg4: memref<16x32xbf16, #tpu.memory_space<vmem>>, %arg5: memref<16x32xbf16, #tpu.memory_space<vmem>>, %arg6: memref<96x64xbf16, #tpu.memory_space<vmem>>, %arg7: memref<1x64xf32, #tpu.memory_space<vmem>>, %arg8: memref<64x64xf32, #tpu.memory_space<vmem>>, %arg9: memref<16x64xbf16, #tpu.memory_space<vmem>>) attributes {dimension_semantics = [#tpu.dimension_semantics<parallel>], iteration_bounds = array<i64: 1>, scalar_prefetch = 0 : i64, scratch_operands = 0 : i64, tpu.core_type = #tpu.core_type<tc>, window_params = [{transform_indices = @transform_0, window_bounds = array<i64: 16, 16>}, {transform_indices = @transform_1, window_bounds = array<i64: 16, 16>}, {transform_indices = @transform_2, window_bounds = array<i64: 16, 2>}, {pipeline_mode = #tpu.pipeline_mode<synchronous>, transform_indices = @transform_3, window_bounds = array<i64: 16, 32>}, {transform_indices = @transform_4, window_bounds = array<i64: 16, 32>}, {pipeline_mode = #tpu.pipeline_mode<synchronous>, transform_indices = @transform_5, window_bounds = array<i64: 96, 64>}, {pipeline_mode = #tpu.pipeline_mode<synchronous>, transform_indices = @transform_6, window_bounds = array<i64: 1, 64>}, {pipeline_mode = #tpu.pipeline_mode<synchronous>, transform_indices = @transform_7, window_bounds = array<i64: 64, 64>}, {transform_indices = @transform_8, window_bounds = array<i64: 16, 64>}]} {
    %c0 = arith.constant 0 : index
    %c0_0 = arith.constant 0 : index
    %0 = vector.load %arg4[%c0, %c0_0] : memref<16x32xbf16, #tpu.memory_space<vmem>>, vector<16x32xbf16>
    %c0_1 = arith.constant 0 : index
    %c0_2 = arith.constant 0 : index
    %1 = vector.load %arg3[%c0_1, %c0_2] : memref<16x2xf32, #tpu.memory_space<vmem>>, vector<16x1xf32>
    %c0_3 = arith.constant 0 : index
    %c1 = arith.constant 1 : index
    %2 = vector.load %arg3[%c0_3, %c1] : memref<16x2xf32, #tpu.memory_space<vmem>>, vector<16x1xf32>
    %c0_4 = arith.constant 0 : index
    %c0_5 = arith.constant 0 : index
    %3 = vector.load %arg1[%c0_4, %c0_5] : memref<16x16xbf16, #tpu.memory_space<vmem>>, vector<16x16xbf16>
    %cst = arith.constant dense<0.000000e+00> : vector<16x32xf32>
    %4 = tpu.matmul %3, %0, %cst {dimension_numbers = #tpu.dot_dimension_numbers<[1], [0], [0], [1], [0, 0, 1, 1], [], []>} : vector<16x16xbf16>, vector<16x32xbf16>, vector<16x32xf32> -> vector<16x32xf32>
    %5 = vector.broadcast %1 : vector<16x1xf32> to vector<16x32xf32>
    %6 = arith.mulf %5, %4 : vector<16x32xf32>
    %c0_6 = arith.constant 0 : index
    %c0_7 = arith.constant 0 : index
    %7 = vector.load %arg2[%c0_6, %c0_7] : memref<16x16xbf16, #tpu.memory_space<vmem>>, vector<16x16xbf16>
    %cst_8 = arith.constant dense<0.000000e+00> : vector<16x32xf32>
    %8 = tpu.matmul %7, %0, %cst_8 {dimension_numbers = #tpu.dot_dimension_numbers<[1], [0], [0], [1], [0, 0, 1, 1], [], []>} : vector<16x16xbf16>, vector<16x32xbf16>, vector<16x32xf32> -> vector<16x32xf32>
    %9 = vector.broadcast %2 : vector<16x1xf32> to vector<16x32xf32>
    %10 = arith.mulf %9, %8 : vector<16x32xf32>
    %11 = arith.truncf %6 : vector<16x32xf32> to vector<16x32xbf16>
    %12 = arith.truncf %10 : vector<16x32xf32> to vector<16x32xbf16>
    %c0_9 = arith.constant 0 : index
    %c0_10 = arith.constant 0 : index
    %13 = vector.load %arg5[%c0_9, %c0_10] : memref<16x32xbf16, #tpu.memory_space<vmem>>, vector<16x32xbf16>
    %14 = tpu.concatenate %11, %12, %13 in 1 : vector<16x32xbf16>, vector<16x32xbf16>, vector<16x32xbf16> -> vector<16x96xbf16>
    %c0_11 = arith.constant 0 : index
    %c0_12 = arith.constant 0 : index
    %15 = vector.load %arg6[%c0_11, %c0_12] : memref<96x64xbf16, #tpu.memory_space<vmem>>, vector<96x64xbf16>
    %cst_13 = arith.constant dense<0.000000e+00> : vector<16x64xf32>
    %16 = tpu.matmul %14, %15, %cst_13 {dimension_numbers = #tpu.dot_dimension_numbers<[1], [0], [0], [1], [0, 0, 1, 1], [], []>} : vector<16x96xbf16>, vector<96x64xbf16>, vector<16x64xf32> -> vector<16x64xf32>
    %c0_14 = arith.constant 0 : index
    %c0_15 = arith.constant 0 : index
    %17 = vector.load %arg7[%c0_14, %c0_15] : memref<1x64xf32, #tpu.memory_space<vmem>>, vector<1x64xf32>
    %18 = vector.broadcast %17 : vector<1x64xf32> to vector<16x64xf32>
    %19 = arith.addf %16, %18 : vector<16x64xf32>
    %20 = arith.mulf %19, %19 : vector<16x64xf32>
    %c0_16 = arith.constant 0 : index
    %c0_17 = arith.constant 0 : index
    %21 = vector.load %arg8[%c0_16, %c0_17] : memref<64x64xf32, #tpu.memory_space<vmem>>, vector<64x64xf32>
    %cst_18 = arith.constant dense<0.000000e+00> : vector<16x64xf32>
    %22 = tpu.matmul %20, %21, %cst_18 {dimension_numbers = #tpu.dot_dimension_numbers<[1], [0], [0], [1], [0, 0, 1, 1], [], []>} : vector<16x64xf32>, vector<64x64xf32>, vector<16x64xf32> -> vector<16x64xf32>
    %cst_19 = arith.constant 1.000000e-24 : f32
    %23 = vector.broadcast %cst_19 : f32 to vector<16x64xf32>
    %24 = arith.maximumf %22, %23 : vector<16x64xf32>
    %25 = math.rsqrt %24 : vector<16x64xf32>
    %26 = arith.mulf %19, %25 : vector<16x64xf32>
    %27 = math.tanh %26 : vector<16x64xf32>
    %28 = arith.truncf %27 : vector<16x64xf32> to vector<16x64xbf16>
    %c0_20 = arith.constant 0 : index
    %c0_21 = arith.constant 0 : index
    %29 = vector.load %arg9[%c0_20, %c0_21] : memref<16x64xbf16, #tpu.memory_space<vmem>>, vector<16x64xbf16>
    tpu.vector_store %arg9[%c0_20, %c0_21], %28 {strides = array<i32>} : memref<16x64xbf16, #tpu.memory_space<vmem>>, vector<16x64xbf16>,
    return
  }
  func.func @transform_0(%arg0: i32) -> (i32, i32) {
    %c0_i32 = arith.constant 0 : i32
    %c0_i32_0 = arith.constant 0 : i32
    return %arg0, %c0_i32 : i32, i32
  }
  func.func @transform_1(%arg0: i32) -> (i32, i32) {
    %c0_i32 = arith.constant 0 : i32
    %c0_i32_0 = arith.constant 0 : i32
    return %arg0, %c0_i32 : i32, i32
  }
  func.func @transform_2(%arg0: i32) -> (i32, i32) {
    %c0_i32 = arith.constant 0 : i32
    %c0_i32_0 = arith.constant 0 : i32
    return %arg0, %c0_i32 : i32, i32
  }
  func.func @transform_3(%arg0: i32) -> (i32, i32) {
    %c0_i32 = arith.constant 0 : i32
    %c0_i32_0 = arith.constant 0 : i32
    %c0_i32_1 = arith.constant 0 : i32
    return %c0_i32, %c0_i32_0 : i32, i32
  }
  func.func @transform_4(%arg0: i32) -> (i32, i32) {
    %c0_i32 = arith.constant 0 : i32
    %c0_i32_0 = arith.constant 0 : i32
    return %arg0, %c0_i32 : i32, i32
  }
  func.func @transform_5(%arg0: i32) -> (i32, i32) {
    %c0_i32 = arith.constant 0 : i32
    %c0_i32_0 = arith.constant 0 : i32
    %c0_i32_1 = arith.constant 0 : i32
    return %c0_i32, %c0_i32_0 : i32, i32
  }
  func.func @transform_6(%arg0: i32) -> (i32, i32) {
    %c0_i32 = arith.constant 0 : i32
    %c0_i32_0 = arith.constant 0 : i32
    %c0_i32_1 = arith.constant 0 : i32
    return %c0_i32, %c0_i32_0 : i32, i32
  }
  func.func @transform_7(%arg0: i32) -> (i32, i32) {
    %c0_i32 = arith.constant 0 : i32
    %c0_i32_0 = arith.constant 0 : i32
    %c0_i32_1 = arith.constant 0 : i32
    return %c0_i32, %c0_i32_0 : i32, i32
  }
  func.func @transform_8(%arg0: i32) -> (i32, i32) {
    %c0_i32 = arith.constant 0 : i32
    %c0_i32_0 = arith.constant 0 : i32
    return %arg0, %c0_i32 : i32, i32
  }
}

</mosaic_0001>

<llo_original>
// kernel: tpu_custom_call.1
$region0: #{tpu_custom_call.1}
  #allocation0 [shape = 'u32[]', space=smem, size = 0x4, offset = 0x4, fixed_abs, tag = 'smem constant byte address 0x4 - core index']
  #allocation1 [shape = 'u32[144,128]{1,0:T(1,128)}', space=vmem, size = 0x12000, scoped, tag = 'internal scratch']
  %s0 = inlined_call_operand.vmem [shape: bf16[16,16], index: 0, kind: input, shape index: {}]
  %s1 = inlined_call_operand.vmem [shape: bf16[16,16], index: 1, kind: input, shape index: {}]
  %s2 = inlined_call_operand.vmem [shape: f32[16,2], index: 2, kind: input, shape index: {}]
  %s3 = inlined_call_operand.vmem [shape: bf16[16,32], index: 3, kind: input, shape index: {}]
  %s4 = inlined_call_operand.vmem [shape: bf16[16,32], index: 4, kind: input, shape index: {}]
  %s5 = inlined_call_operand.vmem [shape: bf16[96,64], index: 5, kind: input, shape index: {}]
  %s6 = inlined_call_operand.vmem [shape: f32[1,64], index: 6, kind: input, shape index: {}]
  %s7 = inlined_call_operand.vmem [shape: f32[64,64], index: 7, kind: input, shape index: {}]
  %s8 = inlined_call_operand.hbm [shape: bf16[16,64], index: 8, kind: output, shape index: {}]
  %s9 = sld [smem:[#allocation0]]
  $region42: #{tpu_custom_call.1} parent=0
    _
  %s11 = ssub.s32 1, %s9
  %s12 = scalar_select 0, %s11, %s9
  $region1: #{tpu_custom_call.1} parent=0
    #allocation2 [shape = 'u8[4096]{0}', space=vmem, size = 0x1000, scoped, tag = 'output window, operand 0, single buffered']
    #allocation3 [shape = 's32[1]{0}', space=sflag, size = 0x4, scoped, tag = 'scoped memory for tpu_custom_call.1']
    %13 = vsyncpa [#allocation3], 0
    // Predicated region
    $region2: #{tpu_custom_call.1} parent=1 // pred_check
      _
    $region3: #{tpu_custom_call.1} parent=1 // pred_check_branch
      %15 = sbr.rel (0) target = $region5
    $region4: #{tpu_custom_call.1} parent=1 // pred_region
      _
    $region5: #{tpu_custom_call.1} parent=1 // pred_fallthru
      _
    // Predicated region
    $region6: #{tpu_custom_call.1} parent=1 // pred_check
      _
    $region7: #{tpu_custom_call.1} parent=1 // pred_check_branch
      %17 = sbr.rel (0) target = $region9
    $region8: #{tpu_custom_call.1} parent=1 // pred_region
      _
    $region9: #{tpu_custom_call.1} parent=1 // pred_fallthru
      _
    // Predicated region
    $region10: #{tpu_custom_call.1} parent=1 // pred_check
      _
    $region11: #{tpu_custom_call.1} parent=1 // pred_check_branch
      %19 = sbr.rel (0) target = $region13
    $region12: #{tpu_custom_call.1} parent=1 // pred_region
      _
    $region13: #{tpu_custom_call.1} parent=1 // pred_fallthru
      _
    // Predicated region
    $region14: #{tpu_custom_call.1} parent=1 // pred_check
      _
    $region15: #{tpu_custom_call.1} parent=1 // pred_check_branch
      %21 = sbr.rel (0) target = $region17
    $region16: #{tpu_custom_call.1} parent=1 // pred_region
      _
    $region17: #{tpu_custom_call.1} parent=1 // pred_fallthru
      _
    // Predicated region
    $region18: #{tpu_custom_call.1} parent=1 // pred_check
      _
    $region19: #{tpu_custom_call.1} parent=1 // pred_check_branch
      %23 = sbr.rel (0) target = $region21
    $region20: #{tpu_custom_call.1} parent=1 // pred_region
      _
    $region21: #{tpu_custom_call.1} parent=1 // pred_fallthru
      _
    // Predicated region
    $region22: #{tpu_custom_call.1} parent=1 // pred_check
      _
    $region23: #{tpu_custom_call.1} parent=1 // pred_check_branch
      %25 = sbr.rel (0) target = $region25
    $region24: #{tpu_custom_call.1} parent=1 // pred_region
      _
    $region25: #{tpu_custom_call.1} parent=1 // pred_fallthru
      _
    // Predicated region
    $region26: #{tpu_custom_call.1} parent=1 // pred_check
      _
    $region27: #{tpu_custom_call.1} parent=1 // pred_check_branch
      %27 = sbr.rel (0) target = $region29
    $region28: #{tpu_custom_call.1} parent=1 // pred_region
      _
    $region29: #{tpu_custom_call.1} parent=1 // pred_fallthru
      _
    // Predicated region
    $region30: #{tpu_custom_call.1} parent=1 // pred_check
      _
    $region31: #{tpu_custom_call.1} parent=1 // pred_check_branch
      %29 = sbr.rel (0) target = $region33
    $region32: #{tpu_custom_call.1} parent=1 // pred_region
      _
    $region33: #{tpu_custom_call.1} parent=1 // pred_fallthru
      _
    %v31 = vld [vmem:[%s3] sm:$0xf]
    %v32 = vld [vmem:[%s3 + $0x4] sm:$0xf]
    %v33 = vld [vmem:[%s2] sm:$0xff]
    %v34 = vld [vmem:[%s2 + $0x8] sm:$0xff]
    %v35 = vld [vmem:[%s0] sm:$0xf]
    %v36 = vld [vmem:[%s0 + $0x4] sm:$0xf]
    %v39 = vunpack.c.l.b16 %v35
    %v40 = vunpack.c.l.b16 %v36
    %v41 = vpack.c.b16 %v40, %v39
    %v44 = vunpack.c.l.b16 %v31
    %v45 = vunpack.c.l.b16 %v32
    %v46 = vpack.c.b16 %v45, %v44
    %vm48 = vcmask 130048
    %v50 = vsel %vm48, %v41, 0
    %52 = vmatprep.subr.bf16.mxu0 0
    %53 = vmatpush1.bf16.msra.mxu0 %v46
    %54 = vmatprep.subr.bf16.mxu0 0
    %55 = vmatpush1.bf16.msra.mxu0 0
    %56 = vmatprep.subr.bf16.mxu0 0
    %57 = vmatpush1.bf16.msra.mxu0 0
    %58 = vmatprep.subr.bf16.mxu0 0
    %59 = vmatpush1.bf16.msra.mxu0 0
    %60 = vmatprep.subr.bf16.mxu0 0
    %61 = vmatpush1.bf16.msra.mxu0 0
    %62 = vmatprep.subr.bf16.mxu0 0
    %63 = vmatpush1.bf16.msra.mxu0 0
    %64 = vmatprep.subr.bf16.mxu0 0
    %65 = vmatpush1.bf16.msra.mxu0 0
    %66 = vmatprep.subr.bf16.mxu0 0
    %67 = vmatpush1.bf16.msra.mxu0 0
    %68 = vmatprep.subr.bf16.mxu0 0
    %69 = vmatpush1.bf16.msra.mxu0 0
    %70 = vmatprep.subr.bf16.mxu0 0
    %71 = vmatpush1.bf16.msra.mxu0 0
    %72 = vmatprep.subr.bf16.mxu0 0
    %73 = vmatpush1.bf16.msra.mxu0 0
    %74 = vmatprep.subr.bf16.mxu0 0
    %75 = vmatpush1.bf16.msra.mxu0 0
    %76 = vmatprep.subr.bf16.mxu0 0
    %77 = vmatpush1.bf16.msra.mxu0 0
    %78 = vmatprep.subr.bf16.mxu0 0
    %79 = vmatpush1.bf16.msra.mxu0 0
    %80 = vmatprep.subr.bf16.mxu0 0
    %81 = vmatpush1.bf16.msra.mxu0 0
    %82 = vmatprep.subr.bf16.mxu0 0
    %83 = vmatpush1.bf16.msra.mxu0 0
    %84 = vmatprep.mubr.bf16.mxu0 0
    %85 = vmatmul.mubr.bf16.gmra.mrb[0].mxu0 %v50
    %v86 = vpop.f32.mrb[0].mxu0
    %v87 = vadd.f32 0.0, %v86
    %v88 = vpop.f32.mrb[0].mxu0
    %v89 = vpop.f32.mrb[0].mxu0
    %v90 = vadd.f32 0.0, %v89
    %v91 = vpop.f32.mrb[0].mxu0
    %92 = vdwg.mxu0
    %94 = vset.pattern.permute.xlu0 0
    %95 = vperm.xlu0 %94, %v33
    %v96 = vpop.permute.xlu0 %95
    %99 = vset.pattern.permute.xlu0 0
    %100 = vperm.xlu0 %99, %v34
    %v101 = vpop.permute.xlu0 %100
    %v103 = vmul.f32 %v96, %v87
    %v104 = vmul.f32 %v101, %v90
    %v105 = vld [vmem:[%s1] sm:$0xf]
    %v106 = vld [vmem:[%s1 + $0x4] sm:$0xf]
    %v109 = vunpack.c.l.b16 %v105
    %v110 = vunpack.c.l.b16 %v106
    %v111 = vpack.c.b16 %v110, %v109
    %v113 = vsel %vm48, %v111, 0
    %115 = vmatprep.subr.bf16.mxu0 0
    %116 = vmatpush1.bf16.msra.mxu0 %v46
    %117 = vmatprep.subr.bf16.mxu0 0
    %118 = vmatpush1.bf16.msra.mxu0 0
    %119 = vmatprep.subr.bf16.mxu0 0
    %120 = vmatpush1.bf16.msra.mxu0 0
    %121 = vmatprep.subr.bf16.mxu0 0
    %122 = vmatpush1.bf16.msra.mxu0 0
    %123 = vmatprep.subr.bf16.mxu0 0
    %124 = vmatpush1.bf16.msra.mxu0 0
    %125 = vmatprep.subr.bf16.mxu0 0
    %126 = vmatpush1.bf16.msra.mxu0 0
    %127 = vmatprep.subr.bf16.mxu0 0
    %128 = vmatpush1.bf16.msra.mxu0 0
    %129 = vmatprep.subr.bf16.mxu0 0
    %130 = vmatpush1.bf16.msra.mxu0 0
    %131 = vmatprep.subr.bf16.mxu0 0
    %132 = vmatpush1.bf16.msra.mxu0 0
    %133 = vmatprep.subr.bf16.mxu0 0
    %134 = vmatpush1.bf16.msra.mxu0 0
    %135 = vmatprep.subr.bf16.mxu0 0
    %136 = vmatpush1.bf16.msra.mxu0 0
    %137 = vmatprep.subr.bf16.mxu0 0
    %138 = vmatpush1.bf16.msra.mxu0 0
    %139 = vmatprep.subr.bf16.mxu0 0
    %140 = vmatpush1.bf16.msra.mxu0 0
    %141 = vmatprep.subr.bf16.mxu0 0
    %142 = vmatpush1.bf16.msra.mxu0 0
    %143 = vmatprep.subr.bf16.mxu0 0
    %144 = vmatpush1.bf16.msra.mxu0 0
    %145 = vmatprep.subr.bf16.mxu0 0
    %146 = vmatpush1.bf16.msra.mxu0 0
    %147 = vmatprep.mubr.bf16.mxu0 0
    %148 = vmatmul.mubr.bf16.gmra.mrb[0].mxu0 %v113
    %v149 = vpop.f32.mrb[0].mxu0
    %v150 = vadd.f32 0.0, %v149
    %v151 = vpop.f32.mrb[0].mxu0
    %v152 = vpop.f32.mrb[0].mxu0
    %v153 = vadd.f32 0.0, %v152
    %v154 = vpop.f32.mrb[0].mxu0
    %155 = vdwg.mxu0
    %156 = vset.pattern.permute.xlu0 1
    %157 = vperm.xlu0 %156, %v33
    %v158 = vpop.permute.xlu0 %157
    %160 = vset.pattern.permute.xlu0 1
    %161 = vperm.xlu0 %160, %v34
    %v162 = vpop.permute.xlu0 %161
    %v164 = vmul.f32 %v158, %v150
    %v165 = vmul.f32 %v162, %v153
    %v166 = vpack.c.bf16 %v104, %v103
    %v167 = vpack.c.bf16 %v165, %v164
    %v168 = vld [vmem:[%s4] sm:$0xf]
    %v169 = vld [vmem:[%s4 + $0x4] sm:$0xf]
    %171 = vrot.lane.b32.xlu0 %v167, 32
    %v172 = vpop.permute.xlu0 %171
    %v175 = vunpack.c.l.b16 %v168
    %v176 = vunpack.c.l.b16 %v169
    %v177 = vpack.c.b16 %v176, %v175
    %178 = vrot.lane.b32.xlu0 %v177, 64
    %v179 = vpop.permute.xlu0 %178
    %vm180 = vcmask 261120
    %v183 = vsel %vm180, %v166, %v172
    %vm184 = vcmask 523264
    %v186 = vsel %vm184, %v183, %v179
    %v187 = vld [vmem:[%s5] sm:$0xf]
    %v188 = vld [vmem:[%s5 + $0x4] sm:$0xf]
    %v189 = vld [vmem:[%s5 + $0x8] sm:$0xf]
    %v190 = vld [vmem:[%s5 + $0xc] sm:$0xf]
    %v191 = vld [vmem:[%s5 + $0x10] sm:$0xf]
    %v192 = vld [vmem:[%s5 + $0x14] sm:$0xf]
    %v193 = vld [vmem:[%s5 + $0x18] sm:$0xf]
    %v194 = vld [vmem:[%s5 + $0x1c] sm:$0xf]
    %v195 = vld [vmem:[%s5 + $0x20] sm:$0xf]
    %v196 = vld [vmem:[%s5 + $0x24] sm:$0xf]
    %v197 = vld [vmem:[%s5 + $0x28] sm:$0xf]
    %v198 = vld [vmem:[%s5 + $0x2c] sm:$0xf]
    %v199 = vld [vmem:[%s6] sm:$0x1]
    %v201 = vlaneseq
    %v202 = vshrl.u32 %v201, 7
    %v203 = vsub.s32 0, %v202
    %v204 = vrot.slane %v199, %v203
    %v218 = vunpack.c.l.b16 %v187
    %v219 = vunpack.c.l.b16 %v188
    %v220 = vunpack.c.l.b16 %v189
    %v221 = vunpack.c.l.b16 %v190
    %v222 = vunpack.c.l.b16 %v191
    %v223 = vunpack.c.l.b16 %v192
    %v224 = vunpack.c.l.b16 %v193
    %v225 = vunpack.c.l.b16 %v194
    %v226 = vunpack.c.l.b16 %v195
    %v227 = vunpack.c.l.b16 %v196
    %v228 = vunpack.c.l.b16 %v197
    %v229 = vunpack.c.l.b16 %v198
    %v230 = vpack.c.b16 %v219, %v218
    %v231 = vpack.c.b16 %v221, %v220
    %v232 = vpack.c.b16 %v223, %v222
    %v233 = vpack.c.b16 %v225, %v224
    %v234 = vpack.c.b16 %v227, %v226
    %v235 = vpack.c.b16 %v229, %v228
    %vm242 = vcmask 785408
    %v243 = vsel %vm242, %v186, 0
    %245 = vmatprep.subr.bf16.mxu0 0
    %246 = vmatpush1.bf16.msra.mxu0 %v230
    %247 = vmatprep.subr.bf16.mxu0 0
    %248 = vmatpush1.bf16.msra.mxu0 %v231
    %249 = vmatprep.subr.bf16.mxu0 0
    %250 = vmatpush1.bf16.msra.mxu0 %v232
    %251 = vmatprep.subr.bf16.mxu0 0
    %252 = vmatpush1.bf16.msra.mxu0 %v233
    %253 = vmatprep.subr.bf16.mxu0 0
    %254 = vmatpush1.bf16.msra.mxu0 %v234
    %255 = vmatprep.subr.bf16.mxu0 0
    %256 = vmatpush1.bf16.msra.mxu0 %v235
    %257 = vmatprep.subr.bf16.mxu0 0
    %258 = vmatpush1.bf16.msra.mxu0 0
    %259 = vmatprep.subr.bf16.mxu0 0
    %260 = vmatpush1.bf16.msra.mxu0 0
    %261 = vmatprep.subr.bf16.mxu0 0
    %262 = vmatpush1.bf16.msra.mxu0 0
    %263 = vmatprep.subr.bf16.mxu0 0
    %264 = vmatpush1.bf16.msra.mxu0 0
    %265 = vmatprep.subr.bf16.mxu0 0
    %266 = vmatpush1.bf16.msra.mxu0 0
    %267 = vmatprep.subr.bf16.mxu0 0
    %268 = vmatpush1.bf16.msra.mxu0 0
    %269 = vmatprep.subr.bf16.mxu0 0
    %270 = vmatpush1.bf16.msra.mxu0 0
    %271 = vmatprep.subr.bf16.mxu0 0
    %272 = vmatpush1.bf16.msra.mxu0 0
    %273 = vmatprep.subr.bf16.mxu0 0
    %274 = vmatpush1.bf16.msra.mxu0 0
    %275 = vmatprep.subr.bf16.mxu0 0
    %276 = vmatpush1.bf16.msra.mxu0 0
    %277 = vmatprep.mubr.bf16.mxu0 0
    %278 = vmatmul.mubr.bf16.gmra.mrb[0].mxu0 %v243
    %v279 = vpop.f32.mrb[0].mxu0
    %v280 = vadd.f32 %v204, %v279
    %v281 = vpop.f32.mrb[0].mxu0
    %v282 = vpop.f32.mrb[0].mxu0
    %v283 = vadd.f32 %v204, %v282
    %v284 = vpop.f32.mrb[0].mxu0
    %285 = vdwg.mxu0
    %v286 = vmul.f32 %v280, %v280
    %v287 = vmul.f32 %v283, %v283
    %v288 = vld [vmem:[%s7] sm:$0xff]
    %v289 = vld [vmem:[%s7 + $0x8] sm:$0xff]
    %v290 = vld [vmem:[%s7 + $0x10] sm:$0xff]
    %v291 = vld [vmem:[%s7 + $0x18] sm:$0xff]
    %v292 = vld [vmem:[%s7 + $0x20] sm:$0xff]
    %v293 = vld [vmem:[%s7 + $0x28] sm:$0xff]
    %v294 = vld [vmem:[%s7 + $0x30] sm:$0xff]
    %v295 = vld [vmem:[%s7 + $0x38] sm:$0xff]
    %v297 = vsel %vm184, %v286, 0
    %v300 = vsel %vm184, %v287, 0
    %302 = vmatprep.subr.mxu0 0.0
    %303 = vmatpush1.msra.mxu0 %v288
    %304 = vmatprep.subr.mxu0 0.0
    %305 = vmatpush1.msra.mxu0 %v289
    %306 = vmatprep.subr.mxu0 0.0
    %307 = vmatpush1.msra.mxu0 %v290
    %308 = vmatprep.subr.mxu0 0.0
    %309 = vmatpush1.msra.mxu0 %v291
    %310 = vmatprep.subr.mxu0 0.0
    %311 = vmatpush1.msra.mxu0 %v292
    %312 = vmatprep.subr.mxu0 0.0
    %313 = vmatpush1.msra.mxu0 %v293
    %314 = vmatprep.subr.mxu0 0.0
    %315 = vmatpush1.msra.mxu0 %v294
    %316 = vmatprep.subr.mxu0 0.0
    %317 = vmatpush1.msra.mxu0 %v295
    %318 = vmatprep.subr.mxu0 0.0
    %319 = vmatpush1.msra.mxu0 0.0
    %320 = vmatprep.subr.mxu0 0.0
    %321 = vmatpush1.msra.mxu0 0.0
    %322 = vmatprep.subr.mxu0 0.0
    %323 = vmatpush1.msra.mxu0 0.0
    %324 = vmatprep.subr.mxu0 0.0
    %325 = vmatpush1.msra.mxu0 0.0
    %326 = vmatprep.subr.mxu0 0.0
    %327 = vmatpush1.msra.mxu0 0.0
    %328 = vmatprep.subr.mxu0 0.0
    %329 = vmatpush1.msra.mxu0 0.0
    %330 = vmatprep.subr.mxu0 0.0
    %331 = vmatpush1.msra.mxu0 0.0
    %332 = vmatprep.subr.mxu0 0.0
    %333 = vmatpush1.msra.mxu0 0.0
    %334 = vmatprep.subr.mxu0 0.0
    %335 = vmatpush1.msra.mxu0 0.0
    %336 = vmatprep.subr.mxu0 0.0
    %337 = vmatpush1.msra.mxu0 0.0
    %338 = vmatprep.subr.mxu0 0.0
    %339 = vmatpush1.msra.mxu0 0.0
    %340 = vmatprep.subr.mxu0 0.0
    %341 = vmatpush1.msra.mxu0 0.0
    %342 = vmatprep.subr.mxu0 0.0
    %343 = vmatpush1.msra.mxu0 0.0
    %344 = vmatprep.subr.mxu0 0.0
    %345 = vmatpush1.msra.mxu0 0.0
    %346 = vmatprep.subr.mxu0 0.0
    %347 = vmatpush1.msra.mxu0 0.0
    %348 = vmatprep.subr.mxu0 0.0
    %349 = vmatpush1.msra.mxu0 0.0
    %350 = vmatprep.subr.mxu0 0.0
    %351 = vmatpush1.msra.mxu0 0.0
    %352 = vmatprep.subr.mxu0 0.0
    %353 = vmatpush1.msra.mxu0 0.0
    %354 = vmatprep.subr.mxu0 0.0
    %355 = vmatpush1.msra.mxu0 0.0
    %356 = vmatprep.subr.mxu0 0.0
    %357 = vmatpush1.msra.mxu0 0.0
    %358 = vmatprep.subr.mxu0 0.0
    %359 = vmatpush1.msra.mxu0 0.0
    %360 = vmatprep.subr.mxu0 0.0
    %361 = vmatpush1.msra.mxu0 0.0
    %362 = vmatprep.subr.mxu0 0.0
    %363 = vmatpush1.msra.mxu0 0.0
    %364 = vmatprep.subr.mxu0 0.0
    %365 = vmatpush1.msra.mxu0 0.0
    %366 = vmatprep.mubr.f32.mxu0 0.0
    %367 = vmatmul.mubr.f32.gmra.mrb[0].mxu0 %v297
    %v368 = vpop.f32.mrb[0].mxu0
    %v369 = vadd.f32 0.0, %v368
    %v370 = vpop.f32.mrb[0].mxu0
    %371 = vmatprep.mubr.f32.mxu0 0.0
    %372 = vmatmul.mubr.f32.gmra.mrb[0].mxu0 %v300
    %v373 = vpop.f32.mrb[0].mxu0
    %v374 = vadd.f32 0.0, %v373
    %v375 = vpop.f32.mrb[0].mxu0
    %376 = vdwg.mxu0
    %v377 = vmax.f32 %v369, 1e-24
    %v378 = vmax.f32 %v374, 1e-24
    %v379 = vrsqrt.pop %v377
    %v380 = vrsqrt.pop %v378
    %v381 = vmul.f32 %v280, %v379
    %v382 = vmul.f32 %v283, %v380
    %v383 = vtanh.pop %v381
    %v384 = vtanh.pop %v382
    %v385 = vpack.c.bf16 %v384, %v383
    %v387 = vunpack.c.l.b16 %v385
    %v388 = vunpack.c.h.b16 %v385
    %v389 = vpack.c.b16 %v387, %v387
    %v390 = vpack.c.b16 %v388, %v388
    %vm393 = vcmask 519168
    %394 = vst.msk [vmem:[#allocation2] sm:$0xf] %vm393, %v389
    %395 = vst.msk [vmem:[#allocation2 + $0x4] sm:$0xf] %vm393, %v390
    // Predicated region
    $region34: #{tpu_custom_call.1} parent=1 // pred_check
      _
    $region35: #{tpu_custom_call.1} parent=1 // pred_check_branch
      %397 = sbr.rel (0) target = $region37
    $region36: #{tpu_custom_call.1} parent=1 // pred_region
      %s399 = ssub.s32 128, 128
      %400 = vsyncadd [#allocation3], %s399
      %s401 = sshll.u32 [#allocation2], 4
      %s402 = int_to_ptr.vmem [resolvable:$true] %s401
      %407 = dma.vmem_to_hbm [thread:$0]  %s402, 128, %s8, [#allocation3], 64, 64, 4
    $region37: #{tpu_custom_call.1} parent=1 // pred_fallthru
      _
    // Predicated region
    $region38: #{tpu_custom_call.1} parent=1 // pred_check
      _
    $region39: #{tpu_custom_call.1} parent=1 // pred_check_branch
      %409 = sbr.rel (0) target = $region41
    $region40: #{tpu_custom_call.1} parent=1 // pred_region
      %410 = dma.done [#allocation3], 128
    $region41: #{tpu_custom_call.1} parent=1 // pred_fallthru
      _
    %411 = vsyncpa [#allocation3], 1

</llo_original>
